<compile_context>
chip_gen: v6e
topology: v6e:2x2x1
jax: 0.10.0
libtpu: 0.0.40
codegen_flags: <defaults>
</compile_context>

<pallas_src>
import jax
import jax.numpy as jnp
from jax.experimental import pallas as pl
from jax.experimental.pallas import tpu as pltpu

D_IN = 243
D_HID = 243
D_OUT = 1
_TB_DEFAULT = 512  # batch tile: 512*243*4 B ~ 486 KiB per buffer, far under scoped VMEM


def _affine_kernel(x_ref, w_ref, b_ref, o_ref):
    """One batch tile: y = sum(x * w_eff, axis=-1) + b_eff."""
    x = x_ref[...]                                   # (TB, 243) f32
    w = w_ref[...]                                   # (1, 243)  f32, broadcasts over rows
    acc = jnp.sum(x * w, axis=1, keepdims=True)      # (TB, 1): VPU multiply + XLU lane reduce
    o_ref[...] = acc + b_ref[...]                    # (TB, 1) + (1, 1)


def prepare_params(w1, b1, w2, b2, w3, b3):
    """One-time fold of the affine stack. Inputs in PyTorch (out, in) layout.

    Returns:
      w_eff: (1, 243) = W3 @ W2 @ W1
      b_eff: (1, 1)   = W3 @ (W2 @ b1 + b2) + b3
    Call once, outside the per-call hot path.
    """
    w_eff = w3 @ w2 @ w1                               # (1, 243)
    b_eff = (w3 @ (w2 @ b1 + b2) + b3).reshape(1, 1)   # (1, 1)
    return jnp.asarray(w_eff, jnp.float32), jnp.asarray(b_eff, jnp.float32)


def network_forward(x, w_eff, b_eff, *, block_b=_TB_DEFAULT):
    """x: (B, 243) f32 -> (B, 1) f32. (w_eff, b_eff) come from prepare_params()."""
    B = x.shape[0]
    tb = min(block_b, B)
    return pl.pallas_call(
        _affine_kernel,
        out_shape=jax.ShapeDtypeStruct((B, D_OUT), jnp.float32),
        grid_spec=pltpu.PrefetchScalarGridSpec(
            num_scalar_prefetch=0,
            grid=(pl.cdiv(B, tb),),
            in_specs=[
                pl.BlockSpec((tb, D_IN), lambda i: (i, 0)),   # x: streamed batch tiles
                pl.BlockSpec((1, D_IN), lambda i: (0, 0)),    # w_eff: VMEM-resident
                pl.BlockSpec((1, 1), lambda i: (0, 0)),       # b_eff: VMEM-resident
            ],
            out_specs=pl.BlockSpec((tb, D_OUT), lambda i: (i, 0)),
        ),
        compiler_params=pltpu.CompilerParams(
            dimension_semantics=("parallel",),                # both TCs on v7x
        ),
    )(x, w_eff, b_eff)


def _init_params(key):
    """Deterministic PyTorch-style uniform(-1/sqrt(fan_in), 1/sqrt(fan_in)) init."""
    ks = jax.random.split(key, 6)

    def uni(k, shape, fan_in):
        bound = 1.0 / jnp.sqrt(jnp.float32(fan_in))
        return jax.random.uniform(k, shape, jnp.float32, -bound, bound)

    w1 = uni(ks[0], (D_HID, D_IN), D_IN)
    b1 = uni(ks[1], (D_HID,), D_IN)
    w2 = uni(ks[2], (D_HID, D_HID), D_HID)
    b2 = uni(ks[3], (D_HID,), D_HID)
    w3 = uni(ks[4], (D_OUT, D_HID), D_HID)
    b3 = uni(ks[5], (D_OUT,), D_HID)
    return w1, b1, w2, b2, w3, b3


def _reference(x, w1, b1, w2, b2, w3, b3):
    """Faithful 3-layer reference (matches the PyTorch forward exactly)."""
    h1 = x @ w1.T + b1
    h2 = h1 @ w2.T + b2
    return h2 @ w3.T + b3


if __name__ == "__main__":
    key = jax.random.PRNGKey(0)
    k_x1, k_x2, k_p = jax.random.split(key, 3)
    params = _init_params(k_p)
    w_eff, b_eff = prepare_params(*params)   # one-time parameter fold, off the hot path

    # Small deterministic example.
    B = 8
    x = jax.random.normal(k_x1, (B, D_IN), jnp.float32)
    y = jax.block_until_ready(network_forward(x, w_eff, b_eff))
    assert y.shape == (B, D_OUT)
    assert jnp.allclose(y, _reference(x, *params), atol=1e-4, rtol=1e-4), \
        "mismatch vs 3-layer JAX reference (B=8)"

    # Larger batch: exercises the tiled, double-buffered, parallel grid path.
    B2 = 1024
    x2 = jax.random.normal(k_x2, (B2, D_IN), jnp.float32)
    y2 = jax.block_until_ready(network_forward(x2, w_eff, b_eff))
    assert y2.shape == (B2, D_OUT)
    assert jnp.allclose(y2, _reference(x2, *params), atol=1e-4, rtol=1e-4), \
        "mismatch vs 3-layer JAX reference (B=1024)"

    print("KERNEL_OK")
</pallas_src>

<mosaic_0001>
module attributes {stable_mosaic.version = 11 : i64} {
  func.func @_affine_kernel(%arg0: i32, %arg1: memref<8x243xf32, #tpu.memory_space<vmem>>, %arg2: memref<1x243xf32, #tpu.memory_space<vmem>>, %arg3: memref<1x1xf32, #tpu.memory_space<vmem>>, %arg4: memref<8x1xf32, #tpu.memory_space<vmem>>) attributes {dimension_semantics = [#tpu.dimension_semantics<parallel>], iteration_bounds = array<i64: 1>, scalar_prefetch = 0 : i64, scratch_operands = 0 : i64, tpu.core_type = #tpu.core_type<tc>, window_params = [{transform_indices = @transform_0, window_bounds = array<i64: 8, 243>}, {pipeline_mode = #tpu.pipeline_mode<synchronous>, transform_indices = @transform_1, window_bounds = array<i64: 1, 243>}, {pipeline_mode = #tpu.pipeline_mode<synchronous>, transform_indices = @transform_2, window_bounds = array<i64: 1, 1>}, {transform_indices = @transform_3, window_bounds = array<i64: 8, 1>}]} {
    %c0 = arith.constant 0 : index
    %c0_0 = arith.constant 0 : index
    %0 = vector.load %arg1[%c0, %c0_0] : memref<8x243xf32, #tpu.memory_space<vmem>>, vector<8x243xf32>
    %c0_1 = arith.constant 0 : index
    %c0_2 = arith.constant 0 : index
    %1 = vector.load %arg2[%c0_1, %c0_2] : memref<1x243xf32, #tpu.memory_space<vmem>>, vector<1x243xf32>
    %2 = vector.broadcast %1 : vector<1x243xf32> to vector<8x243xf32>
    %3 = arith.mulf %0, %2 : vector<8x243xf32>
    %cst = arith.constant dense<0.000000e+00> : vector<8xf32>
    %4 = vector.multi_reduction <add>, %3, %cst [1] : vector<8x243xf32> to vector<8xf32>
    %5 = vector.shape_cast %4 : vector<8xf32> to vector<8x1xf32>
    %c0_3 = arith.constant 0 : index
    %c0_4 = arith.constant 0 : index
    %6 = vector.load %arg3[%c0_3, %c0_4] : memref<1x1xf32, #tpu.memory_space<vmem>>, vector<1x1xf32>
    %7 = vector.broadcast %6 : vector<1x1xf32> to vector<8x1xf32>
    %8 = arith.addf %5, %7 : vector<8x1xf32>
    %c0_5 = arith.constant 0 : index
    %c0_6 = arith.constant 0 : index
    %9 = vector.load %arg4[%c0_5, %c0_6] : memref<8x1xf32, #tpu.memory_space<vmem>>, vector<8x1xf32>
    tpu.vector_store %arg4[%c0_5, %c0_6], %8 {strides = array<i32>} : memref<8x1xf32, #tpu.memory_space<vmem>>, vector<8x1xf32>,
    return
  }
  func.func @transform_0(%arg0: i32) -> (i32, i32) {
    %c0_i32 = arith.constant 0 : i32
    %c0_i32_0 = arith.constant 0 : i32
    return %arg0, %c0_i32 : i32, i32
  }
  func.func @transform_1(%arg0: i32) -> (i32, i32) {
    %c0_i32 = arith.constant 0 : i32
    %c0_i32_0 = arith.constant 0 : i32
    %c0_i32_1 = arith.constant 0 : i32
    return %c0_i32, %c0_i32_0 : i32, i32
  }
  func.func @transform_2(%arg0: i32) -> (i32, i32) {
    %c0_i32 = arith.constant 0 : i32
    %c0_i32_0 = arith.constant 0 : i32
    %c0_i32_1 = arith.constant 0 : i32
    return %c0_i32, %c0_i32_0 : i32, i32
  }
  func.func @transform_3(%arg0: i32) -> (i32, i32) {
    %c0_i32 = arith.constant 0 : i32
    %c0_i32_0 = arith.constant 0 : i32
    return %arg0, %c0_i32 : i32, i32
  }
}

</mosaic_0001>

<llo_original>
// kernel: tpu_custom_call.1
$region0: #{tpu_custom_call.1}
  #allocation0 [shape = 'u32[]', space=smem, size = 0x4, offset = 0x4, fixed_abs, tag = 'smem constant byte address 0x4 - core index']
  #allocation1 [shape = 'u32[144,128]{1,0:T(1,128)}', space=vmem, size = 0x12000, scoped, tag = 'internal scratch']
  #allocation2 [shape = 'f32[1,1]{1,0:T(1,128)S(1)}', space=vmem, size = 0x200, scoped, tag = 'scoped memory for tpu_custom_call.1']
  %s0 = inlined_call_operand.hbm [shape: f32[8,243], index: 0, kind: input, shape index: {}]
  %s1 = inlined_call_operand.vmem [shape: f32[1,243], index: 1, kind: input, shape index: {}]
  %s2 = inlined_call_operand.<no memory space> [shape: f32[1,1], index: 2, kind: input, shape index: {}]
  %s3 = inlined_call_operand.vmem [shape: f32[8,1], index: 3, kind: output, shape index: {}]
  %s4 = sld [smem:[#allocation0]]
  $region26: #{tpu_custom_call.1} parent=0
    _
  %s6 = ssub.s32 1, %s4
  %s7 = scalar_select 0, %s6, %s4
  %v8 = vstv %s2
  %9 = vst [vmem:[#allocation2] sm:$0x1] %v8
  $region1: #{tpu_custom_call.1} parent=0
    #allocation3 [shape = 'u8[8192]{0}', space=vmem, size = 0x2000, scoped, tag = 'input window, operand 0, single buffered']
    #allocation4 [shape = 's32[1]{0}', space=sflag, size = 0x4, scoped, tag = 'scoped memory for tpu_custom_call.1']
    %10 = vsyncpa [#allocation4], 0
    // Predicated region
    $region2: #{tpu_custom_call.1} parent=1 // pred_check
      _
    $region3: #{tpu_custom_call.1} parent=1 // pred_check_branch
      %12 = sbr.rel (0) target = $region5
    $region4: #{tpu_custom_call.1} parent=1 // pred_region
      %s14 = ssub.s32 256, 256
      %15 = vsyncadd [#allocation4], %s14
      %s17 = sshll.u32 [#allocation3], 4
      %s18 = int_to_ptr.vmem [resolvable:$true] %s17
      %20 = dma.hbm_to_vmem [thread:$0]  %s0, 256, %s18, [#allocation4]
    $region5: #{tpu_custom_call.1} parent=1 // pred_fallthru
      _
    // Predicated region
    $region6: #{tpu_custom_call.1} parent=1 // pred_check
      _
    $region7: #{tpu_custom_call.1} parent=1 // pred_check_branch
      %22 = sbr.rel (0) target = $region9
    $region8: #{tpu_custom_call.1} parent=1 // pred_region
      _
    $region9: #{tpu_custom_call.1} parent=1 // pred_fallthru
      _
    // Predicated region
    $region10: #{tpu_custom_call.1} parent=1 // pred_check
      _
    $region11: #{tpu_custom_call.1} parent=1 // pred_check_branch
      %24 = sbr.rel (0) target = $region13
    $region12: #{tpu_custom_call.1} parent=1 // pred_region
      _
    $region13: #{tpu_custom_call.1} parent=1 // pred_fallthru
      _
    // Predicated region
    $region14: #{tpu_custom_call.1} parent=1 // pred_check
      _
    $region15: #{tpu_custom_call.1} parent=1 // pred_check_branch
      %26 = sbr.rel (0) target = $region17
    $region16: #{tpu_custom_call.1} parent=1 // pred_region
      %27 = dma.done [#allocation4], 256
    $region17: #{tpu_custom_call.1} parent=1 // pred_fallthru
      _
    %v28 = vld [vmem:[#allocation3] sm:$0xff]
    %v29 = vld [vmem:[#allocation3 + $0x8] sm:$0xff]
    %v30 = vld [vmem:[%s1] sm:$0x3]
    %v32 = vlaneseq
    %v33 = vshrl.u32 %v32, 7
    %v34 = vsub.s32 0, %v33
    %v35 = vrot.slane %v30, %v34
    %v36 = vlaneseq
    %v37 = vshrl.u32 %v36, 7
    %v38 = vsub.s32 1, %v37
    %v39 = vrot.slane %v30, %v38
    %v42 = vmul.f32 %v28, %v35
    %v43 = vmul.f32 %v29, %v39
    %vm44 = vcmask 941056
    %v45 = vsel %vm44, %v43, 0.0
    %v46 = vadd.f32 %v42, %v45
    %47 = vadd.xlane.f32.xlu0 %v46
    %v48 = vpop.xlane.xlu0 %47
    %v49 = vld [vmem:[#allocation2] sm:$0x1]
    %v51 = vlaneseq
    %v52 = vshrl.u32 %v51, 7
    %v53 = vsub.s32 0, %v52
    %v54 = vrot.slane %v49, %v53
    %v56 = vadd.f32 %v48, %v54
    %vm57 = vcmask 7168
    %58 = vst.msk [vmem:[%s3] sm:$0xff] %vm57, %v56
    // Predicated region
    $region18: #{tpu_custom_call.1} parent=1 // pred_check
      _
    $region19: #{tpu_custom_call.1} parent=1 // pred_check_branch
      %60 = sbr.rel (0) target = $region21
    $region20: #{tpu_custom_call.1} parent=1 // pred_region
      _
    $region21: #{tpu_custom_call.1} parent=1 // pred_fallthru
      _
    // Predicated region
    $region22: #{tpu_custom_call.1} parent=1 // pred_check
      _
    $region23: #{tpu_custom_call.1} parent=1 // pred_check_branch
      %62 = sbr.rel (0) target = $region25
    $region24: #{tpu_custom_call.1} parent=1 // pred_region
      _
    $region25: #{tpu_custom_call.1} parent=1 // pred_fallthru
      _
    %63 = vsyncpa [#allocation4], 1

</llo_original>
